<compile_context>
chip_gen: v7x
topology: tpu7x:2x2x1
jax: 0.10.0
libtpu: 0.0.40
codegen_flags: <defaults>
</compile_context>

<pallas_src>
import jax
import jax.numpy as jnp
import numpy as np
from jax.experimental import pallas as pl
from jax.experimental.pallas import tpu as pltpu


def _round_up(x, m):
    return ((x + m - 1) // m) * m


# ------------------------------ Pallas kernel --------------------------------

def _mlp_kernel(x_ref, w1_ref, b1_ref, w2_ref, b2_ref, o_ref):
    # x_ref : (Bt, N_input)        bf16 (or f32)
    # w1_ref: (N_input, N_hidden)  bf16        b1_ref: (1, N_hidden)   f32
    # w2_ref: (N_hidden, N_pad)    bf16        b2_ref: (1, N_pad)      f32
    # o_ref : (Bt, N_pad)          f32
    h = jnp.dot(x_ref[...], w1_ref[...],
                preferred_element_type=jnp.float32) + b1_ref[...]
    h = jnp.maximum(h, 0.0)                                    # ReLU (f32)
    z = jnp.dot(h.astype(w2_ref.dtype), w2_ref[...],
                preferred_element_type=jnp.float32) + b2_ref[...]
    # sigmoid: exp on the EUP, approximate reciprocal also on the EUP slot.
    o_ref[...] = pl.reciprocal(1.0 + jnp.exp(-z), approx=True)


# ------------------------- one-time parameter prep ---------------------------

def prepare_mlp_params(torch_params, *, compute_dtype=jnp.bfloat16):
    """Transpose PyTorch nn.Linear weights, pad the output dim to a lane-dense
    multiple of 128, and cast matmul operands to the compute dtype.  Do this
    ONCE when parameters are loaded, not per forward call."""
    w1 = jnp.asarray(torch_params["d1_w"]).T                   # (N_in, N_hid)
    b1 = jnp.asarray(torch_params["d1_b"]).reshape(1, -1)      # (1, N_hid)
    w2 = jnp.asarray(torch_params["d2_w"]).T                   # (N_hid, N_out)
    b2 = jnp.asarray(torch_params["d2_b"]).reshape(1, -1)      # (1, N_out)

    n_out = w2.shape[1]
    n_out_pad = _round_up(n_out, 128)                          # lane-dense store
    if n_out_pad != n_out:
        w2 = jnp.pad(w2, ((0, 0), (0, n_out_pad - n_out)))
        b2 = jnp.pad(b2, ((0, 0), (0, n_out_pad - n_out)))

    return {
        "w1": w1.astype(compute_dtype),
        "b1": b1.astype(jnp.float32),
        "w2": w2.astype(compute_dtype),
        "b2": b2.astype(jnp.float32),
        "n_out": n_out,
        "compute_dtype": compute_dtype,
    }


# ------------------------------- forward pass ---------------------------------

def mlp_forward(x, params, *, block_b=256):
    """x: (B, N_input); params: output of prepare_mlp_params."""
    B, n_in = x.shape
    w1, b1, w2, b2 = params["w1"], params["b1"], params["w2"], params["b2"]
    n_hidden = w1.shape[1]
    n_out_pad = w2.shape[1]
    n_out = params["n_out"]

    # Batch tile: multiple of 8, large enough to fill the MXU / amortize
    # per-step overhead, but capped at ~half the batch so the grid keeps
    # >= 2 steps (keeps both v7x TensorCores busy via "parallel").
    bt = _round_up(max(1, -(-B // 2)), 8)          # ceil(B/2), sublane-aligned
    bt = max(8, min(bt, _round_up(block_b, 8)))
    B_pad = _round_up(B, bt)

    x = x.astype(params["compute_dtype"])
    if B_pad != B:
        x = jnp.pad(x, ((0, B_pad - B), (0, 0)))

    out = pl.pallas_call(
        _mlp_kernel,
        out_shape=jax.ShapeDtypeStruct((B_pad, n_out_pad), jnp.float32),
        grid=(B_pad // bt,),
        in_specs=[
            pl.BlockSpec((bt, n_in), lambda i: (i, 0)),          # x tile
            pl.BlockSpec((n_in, n_hidden), lambda i: (0, 0)),    # W1 resident
            pl.BlockSpec((1, n_hidden), lambda i: (0, 0)),       # b1 resident
            pl.BlockSpec((n_hidden, n_out_pad), lambda i: (0, 0)),  # W2 resident
            pl.BlockSpec((1, n_out_pad), lambda i: (0, 0)),      # b2 resident
        ],
        out_specs=pl.BlockSpec((bt, n_out_pad), lambda i: (i, 0)),
        compiler_params=pltpu.CompilerParams(
            dimension_semantics=("parallel",)),
    )(x, w1, b1, w2, b2)

    return out[:B, :n_out]


# ----------------------------- pure-JAX reference ------------------------------

def _reference_forward(x, tp):
    h = jnp.maximum(x @ tp["d1_w"].T + tp["d1_b"], 0.0)
    z = h @ tp["d2_w"].T + tp["d2_b"]
    return jax.nn.sigmoid(z)


# ----------------------------------- main --------------------------------------

def _init_params(key, n_in, n_hidden, n_out):
    ks = jax.random.split(key, 4)
    return {
        "d1_w": jax.random.normal(ks[0], (n_hidden, n_in), jnp.float32) * 0.05,
        "d1_b": jax.random.normal(ks[1], (n_hidden,), jnp.float32) * 0.05,
        "d2_w": jax.random.normal(ks[2], (n_out, n_hidden), jnp.float32) * 0.2,
        "d2_b": jax.random.normal(ks[3], (n_out,), jnp.float32) * 0.05,
    }


if __name__ == "__main__":
    key = jax.random.PRNGKey(0)
    k_x, k_p = jax.random.split(key)

    # MNIST-flattened input implied by the module: N_input = 28*28 = 784.
    B, N_input, N_hidden, N_output = 16, 784, 128, 10
    x = jax.random.normal(k_x, (B, N_input), jnp.float32)
    torch_params = _init_params(k_p, N_input, N_hidden, N_output)

    params = prepare_mlp_params(torch_params)          # one-time prep
    out = mlp_forward(x, params, block_b=256)
    out = jax.block_until_ready(out)

    ref = jax.block_until_ready(_reference_forward(x, torch_params))
    # bf16 operands (f32 accumulate) + approx reciprocal -> relaxed tolerance
    # vs. the f32 reference.
    np.testing.assert_allclose(np.asarray(out), np.asarray(ref),
                               rtol=2e-2, atol=2e-2)
    assert out.shape == (B, N_output)
    print("KERNEL_OK")
</pallas_src>

<mosaic_0001>
module attributes {stable_mosaic.version = 11 : i64} {
  func.func @_mlp_kernel(%arg0: i32, %arg1: memref<8x784xbf16, #tpu.memory_space<vmem>>, %arg2: memref<784x128xbf16, #tpu.memory_space<vmem>>, %arg3: memref<1x128xf32, #tpu.memory_space<vmem>>, %arg4: memref<128x128xbf16, #tpu.memory_space<vmem>>, %arg5: memref<1x128xf32, #tpu.memory_space<vmem>>, %arg6: memref<8x128xf32, #tpu.memory_space<vmem>>) attributes {dimension_semantics = [#tpu.dimension_semantics<parallel>], iteration_bounds = array<i64: 2>, scalar_prefetch = 0 : i64, scratch_operands = 0 : i64, tpu.core_type = #tpu.core_type<tc>, window_params = [{transform_indices = @transform_0, window_bounds = array<i64: 8, 784>}, {pipeline_mode = #tpu.pipeline_mode<synchronous>, transform_indices = @transform_1, window_bounds = array<i64: 784, 128>}, {pipeline_mode = #tpu.pipeline_mode<synchronous>, transform_indices = @transform_2, window_bounds = array<i64: 1, 128>}, {pipeline_mode = #tpu.pipeline_mode<synchronous>, transform_indices = @transform_3, window_bounds = array<i64: 128, 128>}, {pipeline_mode = #tpu.pipeline_mode<synchronous>, transform_indices = @transform_4, window_bounds = array<i64: 1, 128>}, {transform_indices = @transform_5, window_bounds = array<i64: 8, 128>}]} {
    %c0 = arith.constant 0 : index
    %c0_0 = arith.constant 0 : index
    %0 = vector.load %arg1[%c0, %c0_0] : memref<8x784xbf16, #tpu.memory_space<vmem>>, vector<8x784xbf16>
    %c0_1 = arith.constant 0 : index
    %c0_2 = arith.constant 0 : index
    %1 = vector.load %arg2[%c0_1, %c0_2] : memref<784x128xbf16, #tpu.memory_space<vmem>>, vector<784x128xbf16>
    %cst = arith.constant dense<0.000000e+00> : vector<8x128xf32>
    %2 = tpu.matmul %0, %1, %cst {dimension_numbers = #tpu.dot_dimension_numbers<[1], [0], [0], [1], [0, 0, 1, 1], [], []>} : vector<8x784xbf16>, vector<784x128xbf16>, vector<8x128xf32> -> vector<8x128xf32>
    %c0_3 = arith.constant 0 : index
    %c0_4 = arith.constant 0 : index
    %3 = vector.load %arg3[%c0_3, %c0_4] : memref<1x128xf32, #tpu.memory_space<vmem>>, vector<1x128xf32>
    %4 = vector.broadcast %3 : vector<1x128xf32> to vector<8x128xf32>
    %5 = arith.addf %2, %4 : vector<8x128xf32>
    %cst_5 = arith.constant 0.000000e+00 : f32
    %6 = vector.broadcast %cst_5 : f32 to vector<8x128xf32>
    %7 = arith.maximumf %5, %6 : vector<8x128xf32>
    %8 = arith.truncf %7 : vector<8x128xf32> to vector<8x128xbf16>
    %c0_6 = arith.constant 0 : index
    %c0_7 = arith.constant 0 : index
    %9 = vector.load %arg4[%c0_6, %c0_7] : memref<128x128xbf16, #tpu.memory_space<vmem>>, vector<128x128xbf16>
    %cst_8 = arith.constant dense<0.000000e+00> : vector<8x128xf32>
    %10 = tpu.matmul %8, %9, %cst_8 {dimension_numbers = #tpu.dot_dimension_numbers<[1], [0], [0], [1], [0, 0, 1, 1], [], []>} : vector<8x128xbf16>, vector<128x128xbf16>, vector<8x128xf32> -> vector<8x128xf32>
    %c0_9 = arith.constant 0 : index
    %c0_10 = arith.constant 0 : index
    %11 = vector.load %arg5[%c0_9, %c0_10] : memref<1x128xf32, #tpu.memory_space<vmem>>, vector<1x128xf32>
    %12 = vector.broadcast %11 : vector<1x128xf32> to vector<8x128xf32>
    %13 = arith.addf %10, %12 : vector<8x128xf32>
    %cst_11 = arith.constant 0.000000e+00 : f32
    %14 = vector.broadcast %cst_11 : f32 to vector<8x128xf32>
    %15 = arith.subf %14, %13 : vector<8x128xf32>
    %16 = math.exp %15 : vector<8x128xf32>
    %cst_12 = arith.constant 1.000000e+00 : f32
    %17 = vector.broadcast %cst_12 : f32 to vector<8x128xf32>
    %18 = arith.addf %17, %16 : vector<8x128xf32>
    %19 = tpu.reciprocal %18 {approx = true} : vector<8x128xf32> -> vector<8x128xf32>
    %c0_13 = arith.constant 0 : index
    %c0_14 = arith.constant 0 : index
    %20 = vector.load %arg6[%c0_13, %c0_14] : memref<8x128xf32, #tpu.memory_space<vmem>>, vector<8x128xf32>
    tpu.vector_store %arg6[%c0_13, %c0_14], %19 {strides = array<i32>} : memref<8x128xf32, #tpu.memory_space<vmem>>, vector<8x128xf32>,
    return
  }
  func.func @transform_0(%arg0: i32) -> (i32, i32) {
    %c0_i32 = arith.constant 0 : i32
    %c0_i32_0 = arith.constant 0 : i32
    return %arg0, %c0_i32 : i32, i32
  }
  func.func @transform_1(%arg0: i32) -> (i32, i32) {
    %c0_i32 = arith.constant 0 : i32
    %c0_i32_0 = arith.constant 0 : i32
    %c0_i32_1 = arith.constant 0 : i32
    return %c0_i32, %c0_i32_0 : i32, i32
  }
  func.func @transform_2(%arg0: i32) -> (i32, i32) {
    %c0_i32 = arith.constant 0 : i32
    %c0_i32_0 = arith.constant 0 : i32
    %c0_i32_1 = arith.constant 0 : i32
    return %c0_i32, %c0_i32_0 : i32, i32
  }
  func.func @transform_3(%arg0: i32) -> (i32, i32) {
    %c0_i32 = arith.constant 0 : i32
    %c0_i32_0 = arith.constant 0 : i32
    %c0_i32_1 = arith.constant 0 : i32
    return %c0_i32, %c0_i32_0 : i32, i32
  }
  func.func @transform_4(%arg0: i32) -> (i32, i32) {
    %c0_i32 = arith.constant 0 : i32
    %c0_i32_0 = arith.constant 0 : i32
    %c0_i32_1 = arith.constant 0 : i32
    return %c0_i32, %c0_i32_0 : i32, i32
  }
  func.func @transform_5(%arg0: i32) -> (i32, i32) {
    %c0_i32 = arith.constant 0 : i32
    %c0_i32_0 = arith.constant 0 : i32
    return %arg0, %c0_i32 : i32, i32
  }
}

</mosaic_0001>

<llo_original>
// kernel: tpu_custom_call.1
$region0: #{tpu_custom_call.1}
  #allocation0 [shape = 'u32[]', space=smem, size = 0x4, offset = 0x4, fixed_abs, tag = 'smem constant byte address 0x4 - core index']
  #allocation1 [shape = 'u32[144,128]{1,0:T(1,128)}', space=vmem, size = 0x12000, scoped, tag = 'internal scratch']
  %s0 = inlined_call_operand.hbm [shape: bf16[16,784], index: 0, kind: input, shape index: {}]
  %s1 = inlined_call_operand.hbm [shape: bf16[784,128], index: 1, kind: input, shape index: {}]
  %s2 = inlined_call_operand.vmem [shape: f32[1,128], index: 2, kind: input, shape index: {}]
  %s3 = inlined_call_operand.hbm [shape: bf16[128,128], index: 3, kind: input, shape index: {}]
  %s4 = inlined_call_operand.vmem [shape: f32[1,128], index: 4, kind: input, shape index: {}]
  %s5 = inlined_call_operand.hbm [shape: f32[16,128], index: 5, kind: output, shape index: {}]
  %s6 = sld [smem:[#allocation0]]
  $region65: #{tpu_custom_call.1} parent=0
    _
  %s8 = ssub.s32 1, %s6
  %s9 = scalar_select 0, %s8, %s6
  $region1: #{tpu_custom_call.1} parent=0
    #allocation2 [shape = 'u8[28672]{0}', space=vmem, size = 0x7000, scoped, tag = 'input window, operand 0']
    #allocation3 [shape = 's32[2]{0}', space=sflag, size = 0x8, scoped, tag = 'scoped memory for tpu_custom_call.1']
    #allocation4 [shape = 's32[2]{0}', space=sflag, size = 0x8, scoped, tag = 'scoped memory for tpu_custom_call.1']
    #allocation5 [shape = 'u8[200704]{0}', space=vmem, size = 0x31000, scoped, tag = 'input window, operand 1, single buffered']
    #allocation6 [shape = 's32[1]{0}', space=sflag, size = 0x4, scoped, tag = 'scoped memory for tpu_custom_call.1']
    #allocation7 [shape = 'u8[32768]{0}', space=vmem, size = 0x8000, scoped, tag = 'input window, operand 3, single buffered']
    #allocation8 [shape = 'u8[8192]{0}', space=vmem, size = 0x2000, scoped, tag = 'output window, operand 0']
    %10 = vsyncpa [#allocation3], 0
    %s11 = scalar_lea.sflag [#allocation3], 1
    %12 = vsyncpa %s11, 0
    %13 = vsyncpa [#allocation6], 0
    %14 = vsyncpa [#allocation4], 0
    %s15 = scalar_lea.sflag [#allocation4], 1
    %16 = vsyncpa %s15, 0
    loop: start=0, step=1, limit=4
    $region2: #{tpu_custom_call.1} parent=1 // loop_pre_header
      _
    $region3: #{tpu_custom_call.1} parent=1 // loop_header
      %s18 = sphi 0, %s22
      %p19 = scmp.ge.s32.totalorder %s18, 4
      %s28 = sphi 0, %s30
      %s31 = sphi 0, %s28
      %s32 = sphi 0, %s31
      %s48 = sphi 0, %s32
      %s52 = sphi 0, %s52
      %s54 = sphi 0, %s52
      %s55 = sphi 0, %s54
      %s69 = sphi 0, %s55
      %s73 = sphi 0, %s73
      %s75 = sphi 0, %s73
      %s76 = sphi 0, %s75
      %s90 = sphi 0, %s76
      %s94 = sphi 0, %s94
      %s96 = sphi 0, %s94
      %s97 = sphi 0, %s96
      %s111 = sphi 0, %s97
      %s115 = sphi 0, %s115
      %s117 = sphi 0, %s115
      %s118 = sphi 0, %s117
      %s132 = sphi 0, %s118
      %s138 = sphi 0, %s140
      %s141 = sphi 0, %s138
      %s142 = sphi 0, %s141
      %s158 = sphi 0, %s142
    $region4: #{tpu_custom_call.1} parent=1 // loop_header_branch
      %21 = sbr.rel (%p19) target = $region8
    $region5: #{tpu_custom_call.1} parent=1 // loop_body
      %s23 = ssub.s32 %s18, 1
      %s24 = ssub.s32 %s18, 2
      %s25 = sadd.s32 %s18, 1
      %s26 = ssub.s32 %s18, %s25
      %p27 = scmp.eq.s32.totalorder %s26, 0
      %s29 = sadd.s32 %s28, 1
      %s30 = scalar_select %p27, %s28, %s29
      %p33 = pneg %p27
      %p34 = scmp.eq.s32.totalorder %s18, 1
      %p35 = por %p33, %p34
      %p36 = scmp.ne.s32.totalorder %s28, %s31
      %p37 = scmp.eq.s32.totalorder %s18, 0
      %p38 = por %p36, %p37
      %p39 = scmp.ne.s32.totalorder %s28, %s31
      %p40 = scmp.eq.s32.totalorder %s23, 1
      %p41 = por %p39, %p40
      %p42 = scmp.ne.s32.totalorder %s31, %s32
      %p43 = scmp.eq.s32.totalorder %s23, 0
      %p44 = por %p42, %p43
      %p45 = scmp.ne.s32.totalorder %s31, %s32
      %p46 = scmp.eq.s32.totalorder %s24, 1
      %p47 = por %p45, %p46
      %p49 = scmp.ne.s32.totalorder %s32, %s48
      %p50 = scmp.eq.s32.totalorder %s24, 0
      %p51 = por %p49, %p50
      %s53 = sadd.s32 %s52, 1
      %p56 = scmp.eq.s32.totalorder %s18, 1
      %p57 = scmp.ne.s32.totalorder %s52, %s54
      %p58 = scmp.eq.s32.totalorder %s18, 0
      %p59 = por %p57, %p58
      %p60 = scmp.ne.s32.totalorder %s52, %s54
      %p61 = scmp.eq.s32.totalorder %s23, 1
      %p62 = por %p60, %p61
      %p63 = scmp.ne.s32.totalorder %s54, %s55
      %p64 = scmp.eq.s32.totalorder %s23, 0
      %p65 = por %p63, %p64
      %p66 = scmp.ne.s32.totalorder %s54, %s55
      %p67 = scmp.eq.s32.totalorder %s24, 1
      %p68 = por %p66, %p67
      %p70 = scmp.ne.s32.totalorder %s55, %s69
      %p71 = scmp.eq.s32.totalorder %s24, 0
      %p72 = por %p70, %p71
      %s74 = sadd.s32 %s73, 1
      %p77 = scmp.eq.s32.totalorder %s18, 1
      %p78 = scmp.ne.s32.totalorder %s73, %s75
      %p79 = scmp.eq.s32.totalorder %s18, 0
      %p80 = por %p78, %p79
      %p81 = scmp.ne.s32.totalorder %s73, %s75
      %p82 = scmp.eq.s32.totalorder %s23, 1
      %p83 = por %p81, %p82
      %p84 = scmp.ne.s32.totalorder %s75, %s76
      %p85 = scmp.eq.s32.totalorder %s23, 0
      %p86 = por %p84, %p85
      %p87 = scmp.ne.s32.totalorder %s75, %s76
      %p88 = scmp.eq.s32.totalorder %s24, 1
      %p89 = por %p87, %p88
      %p91 = scmp.ne.s32.totalorder %s76, %s90
      %p92 = scmp.eq.s32.totalorder %s24, 0
      %p93 = por %p91, %p92
      %s95 = sadd.s32 %s94, 1
      %p98 = scmp.eq.s32.totalorder %s18, 1
      %p99 = scmp.ne.s32.totalorder %s94, %s96
      %p100 = scmp.eq.s32.totalorder %s18, 0
      %p101 = por %p99, %p100
      %p102 = scmp.ne.s32.totalorder %s94, %s96
      %p103 = scmp.eq.s32.totalorder %s23, 1
      %p104 = por %p102, %p103
      %p105 = scmp.ne.s32.totalorder %s96, %s97
      %p106 = scmp.eq.s32.totalorder %s23, 0
      %p107 = por %p105, %p106
      %p108 = scmp.ne.s32.totalorder %s96, %s97
      %p109 = scmp.eq.s32.totalorder %s24, 1
      %p110 = por %p108, %p109
      %p112 = scmp.ne.s32.totalorder %s97, %s111
      %p113 = scmp.eq.s32.totalorder %s24, 0
      %p114 = por %p112, %p113
      %s116 = sadd.s32 %s115, 1
      %p119 = scmp.eq.s32.totalorder %s18, 1
      %p120 = scmp.ne.s32.totalorder %s115, %s117
      %p121 = scmp.eq.s32.totalorder %s18, 0
      %p122 = por %p120, %p121
      %p123 = scmp.ne.s32.totalorder %s115, %s117
      %p124 = scmp.eq.s32.totalorder %s23, 1
      %p125 = por %p123, %p124
      %p126 = scmp.ne.s32.totalorder %s117, %s118
      %p127 = scmp.eq.s32.totalorder %s23, 0
      %p128 = por %p126, %p127
      %p129 = scmp.ne.s32.totalorder %s117, %s118
      %p130 = scmp.eq.s32.totalorder %s24, 1
      %p131 = por %p129, %p130
      %p133 = scmp.ne.s32.totalorder %s118, %s132
      %p134 = scmp.eq.s32.totalorder %s24, 0
      %p135 = por %p133, %p134
      %s136 = ssub.s32 %s18, %s25
      %p137 = scmp.eq.s32.totalorder %s136, 0
      %s139 = sadd.s32 %s138, 1
      %s140 = scalar_select %p137, %s138, %s139
      %p143 = pneg %p137
      %p144 = scmp.eq.s32.totalorder %s18, 1
      %p145 = por %p143, %p144
      %p146 = scmp.ne.s32.totalorder %s138, %s141
      %p147 = scmp.eq.s32.totalorder %s18, 0
      %p148 = por %p146, %p147
      %p149 = scmp.ne.s32.totalorder %s138, %s141
      %p150 = scmp.eq.s32.totalorder %s23, 1
      %p151 = por %p149, %p150
      %p152 = scmp.ne.s32.totalorder %s141, %s142
      %p153 = scmp.eq.s32.totalorder %s23, 0
      %p154 = por %p152, %p153
      %p155 = scmp.ne.s32.totalorder %s141, %s142
      %p156 = scmp.eq.s32.totalorder %s24, 1
      %p157 = por %p155, %p156
      %p159 = scmp.ne.s32.totalorder %s142, %s158
      %p160 = scmp.eq.s32.totalorder %s24, 0
      %p161 = por %p159, %p160
      %p162 = scmp.le.s32.totalorder 1, %s18
      %p163 = scmp.lt.s32.totalorder %s18, 3
      %p164 = pnand %p162, %p163
      %p165 = pneg %p164
      // Predicated region
      $region9: #{tpu_custom_call.1} parent=5 // pred_check
        _
      $region10: #{tpu_custom_call.1} parent=5 // pred_check_branch
        %167 = sbr.rel (%p164) target = $region12
      $region11: #{tpu_custom_call.1} parent=5 // pred_region
        %s168 = ssub.s32 %s18, 1
        // Predicated region
        $region13: #{tpu_custom_call.1} parent=11 // pred_check
          %p169 = pneg %p65
        $region14: #{tpu_custom_call.1} parent=11 // pred_check_branch
          %171 = sbr.rel (%p169) target = $region16
        $region15: #{tpu_custom_call.1} parent=11 // pred_region
          %s173 = ssub.s32 6272, 6272
          %174 = vsyncadd [#allocation6], %s173
          %s175 = sshll.u32 [#allocation5], 4
          %s176 = int_to_ptr.vmem [resolvable:$true] %s175
          %181 = dma.hbm_to_vmem [thread:$0]  %s1, 6272, %s176, [#allocation6], 64, 64, 4
        $region16: #{tpu_custom_call.1} parent=11 // pred_fallthru
          _
        // Predicated region
        $region17: #{tpu_custom_call.1} parent=11 // pred_check
          %p182 = pneg %p86
        $region18: #{tpu_custom_call.1} parent=11 // pred_check_branch
          %184 = sbr.rel (%p182) target = $region20
        $region19: #{tpu_custom_call.1} parent=11 // pred_region
          _
        $region20: #{tpu_custom_call.1} parent=11 // pred_fallthru
          _
        // Predicated region
        $region21: #{tpu_custom_call.1} parent=11 // pred_check
          %p185 = pneg %p107
        $region22: #{tpu_custom_call.1} parent=11 // pred_check_branch
          %187 = sbr.rel (%p185) target = $region24
        $region23: #{tpu_custom_call.1} parent=11 // pred_region
          %s189 = ssub.s32 1024, 1024
          %190 = vsyncadd [#allocation6], %s189
          %s191 = sshll.u32 [#allocation7], 4
          %s192 = int_to_ptr.vmem [resolvable:$true] %s191
          %197 = dma.hbm_to_vmem [thread:$0]  %s3, 1024, %s192, [#allocation6], 64, 64, 4
        $region24: #{tpu_custom_call.1} parent=11 // pred_fallthru
          _
        // Predicated region
        $region25: #{tpu_custom_call.1} parent=11 // pred_check
          %p198 = pneg %p128
        $region26: #{tpu_custom_call.1} parent=11 // pred_check_branch
          %200 = sbr.rel (%p198) target = $region28
        $region27: #{tpu_custom_call.1} parent=11 // pred_region
          _
        $region28: #{tpu_custom_call.1} parent=11 // pred_fallthru
          _
      $region12: #{tpu_custom_call.1} parent=5 // pred_fallthru
        _
      %p201 = scmp.lt.s32.totalorder %s18, 2
      // Predicated region
      $region29: #{tpu_custom_call.1} parent=5 // pred_check
        %p202 = pneg %p201
      $region30: #{tpu_custom_call.1} parent=5 // pred_check_branch
        %204 = sbr.rel (%p202) target = $region32
      $region31: #{tpu_custom_call.1} parent=5 // pred_region
        // Predicated region
        $region33: #{tpu_custom_call.1} parent=31 // pred_check
          %p205 = pneg %p38
        $region34: #{tpu_custom_call.1} parent=31 // pred_check_branch
          %207 = sbr.rel (%p205) target = $region36
        $region35: #{tpu_custom_call.1} parent=31 // pred_region
          %s208 = sand.u32 %s28, 1
          %s209 = scalar_lea.sflag [#allocation3], %s208
          %s210 = sand.u32 %s28, 1
          %s211 = smul.addr %s210, 28
          %s212 = scalar_lea.vmem [#allocation2], %s211
          %s214 = ssub.s32 448, 448
          %215 = vsyncadd %s209, %s214
          %s216 = smul.addr %s18, 7
          %s217 = smul.addr %s216, 64
          %s218 = scalar_lea.hbm %s0, %s217
          %s220 = sshll.u32 %s212, 4
          %s221 = int_to_ptr.vmem [resolvable:$true] %s220
          %223 = dma.hbm_to_vmem [thread:$0]  %s218, 448, %s221, %s209
        $region36: #{tpu_custom_call.1} parent=31 // pred_fallthru
          _
      $region32: #{tpu_custom_call.1} parent=5 // pred_fallthru
        _
      %p224 = scmp.le.s32.totalorder 1, %s18
      %p225 = scmp.lt.s32.totalorder %s18, 3
      %p226 = pnand %p224, %p225
      %p227 = pneg %p226
      // Predicated region
      $region37: #{tpu_custom_call.1} parent=5 // pred_check
        _
      $region38: #{tpu_custom_call.1} parent=5 // pred_check_branch
        %229 = sbr.rel (%p226) target = $region40
      $region39: #{tpu_custom_call.1} parent=5 // pred_region
        %s230 = ssub.s32 %s18, 1
        %s231 = sand.u32 %s31, 1
        %s232 = scalar_lea.sflag [#allocation3], %s231
        %s233 = sand.u32 %s31, 1
        %s234 = smul.addr %s233, 28
        %s235 = scalar_lea.vmem [#allocation2], %s234
        // Predicated region
        $region41: #{tpu_custom_call.1} parent=39 // pred_check
          %p236 = pneg %p44
        $region42: #{tpu_custom_call.1} parent=39 // pred_check_branch
          %238 = sbr.rel (%p236) target = $region44
        $region43: #{tpu_custom_call.1} parent=39 // pred_region
          %239 = dma.done %s232, 448
        $region44: #{tpu_custom_call.1} parent=39 // pred_fallthru
          _
        // Predicated region
        $region45: #{tpu_custom_call.1} parent=39 // pred_check
          %p240 = pneg %p65
        $region46: #{tpu_custom_call.1} parent=39 // pred_check_branch
          %242 = sbr.rel (%p240) target = $region48
        $region47: #{tpu_custom_call.1} parent=39 // pred_region
          %243 = dma.done [#allocation6], 6272
        $region48: #{tpu_custom_call.1} parent=39 // pred_fallthru
          _
        // Predicated region
        $region49: #{tpu_custom_call.1} parent=39 // pred_check
          %p244 = pneg %p107
        $region50: #{tpu_custom_call.1} parent=39 // pred_check_branch
          %246 = sbr.rel (%p244) target = $region52
        $region51: #{tpu_custom_call.1} parent=39 // pred_region
          %247 = dma.done [#allocation6], 1024
        $region52: #{tpu_custom_call.1} parent=39 // pred_fallthru
          _
        %s248 = sand.u32 %s31, 1
        %s249 = scalar_lea.sflag [#allocation3], %s248
        %s250 = sand.u32 %s31, 1
        %s251 = smul.addr %s250, 28
        %s252 = scalar_lea.vmem [#allocation2], %s251
        %p253 = pneg %p44
        %p254 = pneg %p41
        %p255 = pneg %p65
        %p256 = pneg %p62
        %p257 = pneg %p86
        %p258 = pneg %p83
        %p259 = pneg %p107
        %p260 = pneg %p104
        %p261 = pneg %p128
        %p262 = pneg %p125
        %p263 = pneg %p154
        %p264 = pneg %p151
        %s265 = sand.u32 %s141, 1
        %s266 = scalar_lea.sflag [#allocation4], %s265
        %s267 = sand.u32 %s141, 1
        %s268 = smul.addr %s267, 8
        %s269 = scalar_lea.vmem [#allocation8], %s268
        %v271 = vld [vmem:[%s235] sm:$0xff]
        %v272 = vld [vmem:[%s235 + $0x8] sm:$0xff]
        %v273 = vld [vmem:[%s235 + $0x10] sm:$0xff]
        %v274 = vld [vmem:[%s235 + $0x18] sm:$0xf]
        %v275 = vld [vmem:[#allocation5] sm:$0xf]
        %v276 = vld [vmem:[#allocation5 + $0x4] sm:$0xf]
        %v277 = vld [vmem:[#allocation5 + $0x8] sm:$0xf]
        %v278 = vld [vmem:[#allocation5 + $0xc] sm:$0xf]
        %v279 = vld [vmem:[#allocation5 + $0x10] sm:$0xf]
        %v280 = vld [vmem:[#allocation5 + $0x14] sm:$0xf]
        %v281 = vld [vmem:[#allocation5 + $0x18] sm:$0xf]
        %v282 = vld [vmem:[#allocation5 + $0x1c] sm:$0xf]
        %v283 = vld [vmem:[#allocation5 + $0x20] sm:$0xf]
        %v284 = vld [vmem:[#allocation5 + $0x24] sm:$0xf]
        %v285 = vld [vmem:[#allocation5 + $0x28] sm:$0xf]
        %v286 = vld [vmem:[#allocation5 + $0x2c] sm:$0xf]
        %v287 = vld [vmem:[#allocation5 + $0x30] sm:$0xf]
        %v288 = vld [vmem:[#allocation5 + $0x34] sm:$0xf]
        %v289 = vld [vmem:[#allocation5 + $0x38] sm:$0xf]
        %v290 = vld [vmem:[#allocation5 + $0x3c] sm:$0xf]
        %v291 = vld [vmem:[#allocation5 + $0x40] sm:$0xf]
        %v292 = vld [vmem:[#allocation5 + $0x44] sm:$0xf]
        %v293 = vld [vmem:[#allocation5 + $0x48] sm:$0xf]
        %v294 = vld [vmem:[#allocation5 + $0x4c] sm:$0xf]
        %v295 = vld [vmem:[#allocation5 + $0x50] sm:$0xf]
        %v296 = vld [vmem:[#allocation5 + $0x54] sm:$0xf]
        %v297 = vld [vmem:[#allocation5 + $0x58] sm:$0xf]
        %v298 = vld [vmem:[#allocation5 + $0x5c] sm:$0xf]
        %v299 = vld [vmem:[#allocation5 + $0x60] sm:$0xf]
        %v300 = vld [vmem:[#allocation5 + $0x64] sm:$0xf]
        %v301 = vld [vmem:[#allocation5 + $0x68] sm:$0xf]
        %v302 = vld [vmem:[#allocation5 + $0x6c] sm:$0xf]
        %v303 = vld [vmem:[#allocation5 + $0x70] sm:$0xf]
        %v304 = vld [vmem:[#allocation5 + $0x74] sm:$0xf]
        %v305 = vld [vmem:[#allocation5 + $0x78] sm:$0xf]
        %v306 = vld [vmem:[#allocation5 + $0x7c] sm:$0xf]
        %v307 = vld [vmem:[#allocation5 + $0x80] sm:$0xf]
        %v308 = vld [vmem:[#allocation5 + $0x84] sm:$0xf]
        %v309 = vld [vmem:[#allocation5 + $0x88] sm:$0xf]
        %v310 = vld [vmem:[#allocation5 + $0x8c] sm:$0xf]
        %v311 = vld [vmem:[#allocation5 + $0x90] sm:$0xf]
        %v312 = vld [vmem:[#allocation5 + $0x94] sm:$0xf]
        %v313 = vld [vmem:[#allocation5 + $0x98] sm:$0xf]
        %v314 = vld [vmem:[#allocation5 + $0x9c] sm:$0xf]
        %v315 = vld [vmem:[#allocation5 + $0xa0] sm:$0xf]
        %v316 = vld [vmem:[#allocation5 + $0xa4] sm:$0xf]
        %v317 = vld [vmem:[#allocation5 + $0xa8] sm:$0xf]
        %v318 = vld [vmem:[#allocation5 + $0xac] sm:$0xf]
        %v319 = vld [vmem:[#allocation5 + $0xb0] sm:$0xf]
        %v320 = vld [vmem:[#allocation5 + $0xb4] sm:$0xf]
        %v321 = vld [vmem:[#allocation5 + $0xb8] sm:$0xf]
        %v322 = vld [vmem:[#allocation5 + $0xbc] sm:$0xf]
        %v323 = vld [vmem:[#allocation5 + $0xc0] sm:$0xf]
        %v324 = vld [vmem:[#allocation5 + $0xc4] sm:$0xf]
        %v325 = vld [vmem:[#allocation5 + $0xc8] sm:$0xf]
        %v326 = vld [vmem:[#allocation5 + $0xcc] sm:$0xf]
        %v327 = vld [vmem:[#allocation5 + $0xd0] sm:$0xf]
        %v328 = vld [vmem:[#allocation5 + $0xd4] sm:$0xf]
        %v329 = vld [vmem:[#allocation5 + $0xd8] sm:$0xf]
        %v330 = vld [vmem:[#allocation5 + $0xdc] sm:$0xf]
        %v331 = vld [vmem:[#allocation5 + $0xe0] sm:$0xf]
        %v332 = vld [vmem:[#allocation5 + $0xe4] sm:$0xf]
        %v333 = vld [vmem:[#allocation5 + $0xe8] sm:$0xf]
        %v334 = vld [vmem:[#allocation5 + $0xec] sm:$0xf]
        %v335 = vld [vmem:[#allocation5 + $0xf0] sm:$0xf]
        %v336 = vld [vmem:[#allocation5 + $0xf4] sm:$0xf]
        %v337 = vld [vmem:[#allocation5 + $0xf8] sm:$0xf]
        %v338 = vld [vmem:[#allocation5 + $0xfc] sm:$0xf]
        %v339 = vld [vmem:[#allocation5 + $0x100] sm:$0xf]
        %v340 = vld [vmem:[#allocation5 + $0x104] sm:$0xf]
        %v341 = vld [vmem:[#allocation5 + $0x108] sm:$0xf]
        %v342 = vld [vmem:[#allocation5 + $0x10c] sm:$0xf]
        %v343 = vld [vmem:[#allocation5 + $0x110] sm:$0xf]
        %v344 = vld [vmem:[#allocation5 + $0x114] sm:$0xf]
        %v345 = vld [vmem:[#allocation5 + $0x118] sm:$0xf]
        %v346 = vld [vmem:[#allocation5 + $0x11c] sm:$0xf]
        %v347 = vld [vmem:[#allocation5 + $0x120] sm:$0xf]
        %v348 = vld [vmem:[#allocation5 + $0x124] sm:$0xf]
        %v349 = vld [vmem:[#allocation5 + $0x128] sm:$0xf]
        %v350 = vld [vmem:[#allocation5 + $0x12c] sm:$0xf]
        %v351 = vld [vmem:[#allocation5 + $0x130] sm:$0xf]
        %v352 = vld [vmem:[#allocation5 + $0x134] sm:$0xf]
        %v353 = vld [vmem:[#allocation5 + $0x138] sm:$0xf]
        %v354 = vld [vmem:[#allocation5 + $0x13c] sm:$0xf]
        %v355 = vld [vmem:[#allocation5 + $0x140] sm:$0xf]
        %v356 = vld [vmem:[#allocation5 + $0x144] sm:$0xf]
        %v357 = vld [vmem:[#allocation5 + $0x148] sm:$0xf]
        %v358 = vld [vmem:[#allocation5 + $0x14c] sm:$0xf]
        %v359 = vld [vmem:[#allocation5 + $0x150] sm:$0xf]
        %v360 = vld [vmem:[#allocation5 + $0x154] sm:$0xf]
        %v361 = vld [vmem:[#allocation5 + $0x158] sm:$0xf]
        %v362 = vld [vmem:[#allocation5 + $0x15c] sm:$0xf]
        %v363 = vld [vmem:[#allocation5 + $0x160] sm:$0xf]
        %v364 = vld [vmem:[#allocation5 + $0x164] sm:$0xf]
        %v365 = vld [vmem:[#allocation5 + $0x168] sm:$0xf]
        %v366 = vld [vmem:[#allocation5 + $0x16c] sm:$0xf]
        %v367 = vld [vmem:[#allocation5 + $0x170] sm:$0xf]
        %v368 = vld [vmem:[#allocation5 + $0x174] sm:$0xf]
        %v369 = vld [vmem:[#allocation5 + $0x178] sm:$0xf]
        %v370 = vld [vmem:[#allocation5 + $0x17c] sm:$0xf]
        %v371 = vld [vmem:[#allocation5 + $0x180] sm:$0xf]
        %v372 = vld [vmem:[#allocation5 + $0x184] sm:$0xf]
        %v373 = vld [vmem:[%s2] sm:$0x1]
        %v375 = vlaneseq
        %v376 = vshrl.u32 %v375, 7
        %v377 = vsub.s32 0, %v376
        %v378 = vrot.slane %v373, %v377
        %v384 = vunpack.c.l.b16 %v271
        %v385 = vunpack.c.h.b16 %v271
        %v386 = vunpack.c.l.b16 %v272
        %v387 = vunpack.c.h.b16 %v272
        %v388 = vunpack.c.l.b16 %v273
        %v389 = vunpack.c.h.b16 %v273
        %v390 = vunpack.c.l.b16 %v274
        %v391 = vpack.c.b16 %v384, %v384
        %v392 = vpack.c.b16 %v385, %v385
        %v393 = vpack.c.b16 %v386, %v386
        %v394 = vpack.c.b16 %v387, %v387
        %v395 = vpack.c.b16 %v388, %v388
        %v396 = vpack.c.b16 %v389, %v389
        %v397 = vpack.c.b16 %v390, %v390
        %v502 = vunpack.c.l.b16 %v275
        %v503 = vunpack.c.l.b16 %v276
        %v504 = vunpack.c.l.b16 %v277
        %v505 = vunpack.c.l.b16 %v278
        %v506 = vunpack.c.l.b16 %v279
        %v507 = vunpack.c.l.b16 %v280
        %v508 = vunpack.c.l.b16 %v281
        %v509 = vunpack.c.l.b16 %v282
        %v510 = vunpack.c.l.b16 %v283
        %v511 = vunpack.c.l.b16 %v284
        %v512 = vunpack.c.l.b16 %v285
        %v513 = vunpack.c.l.b16 %v286
        %v514 = vunpack.c.l.b16 %v287
        %v515 = vunpack.c.l.b16 %v288
        %v516 = vunpack.c.l.b16 %v289
        %v517 = vunpack.c.l.b16 %v290
        %v518 = vunpack.c.l.b16 %v291
        %v519 = vunpack.c.l.b16 %v292
        %v520 = vunpack.c.l.b16 %v293
        %v521 = vunpack.c.l.b16 %v294
        %v522 = vunpack.c.l.b16 %v295
        %v523 = vunpack.c.l.b16 %v296
        %v524 = vunpack.c.l.b16 %v297
        %v525 = vunpack.c.l.b16 %v298
        %v526 = vunpack.c.l.b16 %v299
        %v527 = vunpack.c.l.b16 %v300
        %v528 = vunpack.c.l.b16 %v301
        %v529 = vunpack.c.l.b16 %v302
        %v530 = vunpack.c.l.b16 %v303
        %v531 = vunpack.c.l.b16 %v304
        %v532 = vunpack.c.l.b16 %v305
        %v533 = vunpack.c.l.b16 %v306
        %v534 = vunpack.c.l.b16 %v307
        %v535 = vunpack.c.l.b16 %v308
        %v536 = vunpack.c.l.b16 %v309
        %v537 = vunpack.c.l.b16 %v310
        %v538 = vunpack.c.l.b16 %v311
        %v539 = vunpack.c.l.b16 %v312
        %v540 = vunpack.c.l.b16 %v313
        %v541 = vunpack.c.l.b16 %v314
        %v542 = vunpack.c.l.b16 %v315
        %v543 = vunpack.c.l.b16 %v316
        %v544 = vunpack.c.l.b16 %v317
        %v545 = vunpack.c.l.b16 %v318
        %v546 = vunpack.c.l.b16 %v319
        %v547 = vunpack.c.l.b16 %v320
        %v548 = vunpack.c.l.b16 %v321
        %v549 = vunpack.c.l.b16 %v322
        %v550 = vunpack.c.l.b16 %v323
        %v551 = vunpack.c.l.b16 %v324
        %v552 = vunpack.c.l.b16 %v325
        %v553 = vunpack.c.l.b16 %v326
        %v554 = vunpack.c.l.b16 %v327
        %v555 = vunpack.c.l.b16 %v328
        %v556 = vunpack.c.l.b16 %v329
        %v557 = vunpack.c.l.b16 %v330
        %v558 = vunpack.c.l.b16 %v331
        %v559 = vunpack.c.l.b16 %v332
        %v560 = vunpack.c.l.b16 %v333
        %v561 = vunpack.c.l.b16 %v334
        %v562 = vunpack.c.l.b16 %v335
        %v563 = vunpack.c.l.b16 %v336
        %v564 = vunpack.c.l.b16 %v337
        %v565 = vunpack.c.l.b16 %v338
        %v566 = vunpack.c.l.b16 %v339
        %v567 = vunpack.c.l.b16 %v340
        %v568 = vunpack.c.l.b16 %v341
        %v569 = vunpack.c.l.b16 %v342
        %v570 = vunpack.c.l.b16 %v343
        %v571 = vunpack.c.l.b16 %v344
        %v572 = vunpack.c.l.b16 %v345
        %v573 = vunpack.c.l.b16 %v346
        %v574 = vunpack.c.l.b16 %v347
        %v575 = vunpack.c.l.b16 %v348
        %v576 = vunpack.c.l.b16 %v349
        %v577 = vunpack.c.l.b16 %v350
        %v578 = vunpack.c.l.b16 %v351
        %v579 = vunpack.c.l.b16 %v352
        %v580 = vunpack.c.l.b16 %v353
        %v581 = vunpack.c.l.b16 %v354
        %v582 = vunpack.c.l.b16 %v355
        %v583 = vunpack.c.l.b16 %v356
        %v584 = vunpack.c.l.b16 %v357
        %v585 = vunpack.c.l.b16 %v358
        %v586 = vunpack.c.l.b16 %v359
        %v587 = vunpack.c.l.b16 %v360
        %v588 = vunpack.c.l.b16 %v361
        %v589 = vunpack.c.l.b16 %v362
        %v590 = vunpack.c.l.b16 %v363
        %v591 = vunpack.c.l.b16 %v364
        %v592 = vunpack.c.l.b16 %v365
        %v593 = vunpack.c.l.b16 %v366
        %v594 = vunpack.c.l.b16 %v367
        %v595 = vunpack.c.l.b16 %v368
        %v596 = vunpack.c.l.b16 %v369
        %v597 = vunpack.c.l.b16 %v370
        %v598 = vunpack.c.l.b16 %v371
        %v599 = vunpack.c.l.b16 %v372
        %v600 = vpack.c.b16 %v503, %v502
        %v601 = vpack.c.b16 %v505, %v504
        %v602 = vpack.c.b16 %v507, %v506
        %v603 = vpack.c.b16 %v509, %v508
        %v604 = vpack.c.b16 %v511, %v510
        %v605 = vpack.c.b16 %v513, %v512
        %v606 = vpack.c.b16 %v515, %v514
        %v607 = vpack.c.b16 %v517, %v516
        %v608 = vpack.c.b16 %v519, %v518
        %v609 = vpack.c.b16 %v521, %v520
        %v610 = vpack.c.b16 %v523, %v522
        %v611 = vpack.c.b16 %v525, %v524
        %v612 = vpack.c.b16 %v527, %v526
        %v613 = vpack.c.b16 %v529, %v528
        %v614 = vpack.c.b16 %v531, %v530
        %v615 = vpack.c.b16 %v533, %v532
        %v616 = vpack.c.b16 %v535, %v534
        %v617 = vpack.c.b16 %v537, %v536
        %v618 = vpack.c.b16 %v539, %v538
        %v619 = vpack.c.b16 %v541, %v540
        %v620 = vpack.c.b16 %v543, %v542
        %v621 = vpack.c.b16 %v545, %v544
        %v622 = vpack.c.b16 %v547, %v546
        %v623 = vpack.c.b16 %v549, %v548
        %v624 = vpack.c.b16 %v551, %v550
        %v625 = vpack.c.b16 %v553, %v552
        %v626 = vpack.c.b16 %v555, %v554
        %v627 = vpack.c.b16 %v557, %v556
        %v628 = vpack.c.b16 %v559, %v558
        %v629 = vpack.c.b16 %v561, %v560
        %v630 = vpack.c.b16 %v563, %v562
        %v631 = vpack.c.b16 %v565, %v564
        %v632 = vpack.c.b16 %v567, %v566
        %v633 = vpack.c.b16 %v569, %v568
        %v634 = vpack.c.b16 %v571, %v570
        %v635 = vpack.c.b16 %v573, %v572
        %v636 = vpack.c.b16 %v575, %v574
        %v637 = vpack.c.b16 %v577, %v576
        %v638 = vpack.c.b16 %v579, %v578
        %v639 = vpack.c.b16 %v581, %v580
        %v640 = vpack.c.b16 %v583, %v582
        %v641 = vpack.c.b16 %v585, %v584
        %v642 = vpack.c.b16 %v587, %v586
        %v643 = vpack.c.b16 %v589, %v588
        %v644 = vpack.c.b16 %v591, %v590
        %v645 = vpack.c.b16 %v593, %v592
        %v646 = vpack.c.b16 %v595, %v594
        %v647 = vpack.c.b16 %v597, %v596
        %v648 = vpack.c.b16 %v599, %v598
        %vm698 = vcmask 130048
        %v700 = vsel %vm698, %v397, 0
        %702 = vmatprep.subr.bf16.mxu0 0
        %703 = vmatpush1.bf16.msra.mxu0 %v600
        %704 = vmatprep.subr.bf16.mxu0 0
        %705 = vmatpush1.bf16.msra.mxu0 %v601
        %706 = vmatprep.subr.bf16.mxu0 0
        %707 = vmatpush1.bf16.msra.mxu0 %v602
        %708 = vmatprep.subr.bf16.mxu0 0
        %709 = vmatpush1.bf16.msra.mxu0 %v603
        %710 = vmatprep.subr.bf16.mxu0 0
        %711 = vmatpush1.bf16.msra.mxu0 %v604
        %712 = vmatprep.subr.bf16.mxu0 0
        %713 = vmatpush1.bf16.msra.mxu0 %v605
        %714 = vmatprep.subr.bf16.mxu0 0
        %715 = vmatpush1.bf16.msra.mxu0 %v606
        %716 = vmatprep.subr.bf16.mxu0 0
        %717 = vmatpush1.bf16.msra.mxu0 %v607
        %718 = vmatprep.subr.bf16.mxu0 0
        %719 = vmatpush1.bf16.msra.mxu0 %v608
        %720 = vmatprep.subr.bf16.mxu0 0
        %721 = vmatpush1.bf16.msra.mxu0 %v609
        %722 = vmatprep.subr.bf16.mxu0 0
        %723 = vmatpush1.bf16.msra.mxu0 %v610
        %724 = vmatprep.subr.bf16.mxu0 0
        %725 = vmatpush1.bf16.msra.mxu0 %v611
        %726 = vmatprep.subr.bf16.mxu0 0
        %727 = vmatpush1.bf16.msra.mxu0 %v612
        %728 = vmatprep.subr.bf16.mxu0 0
        %729 = vmatpush1.bf16.msra.mxu0 %v613
        %730 = vmatprep.subr.bf16.mxu0 0
        %731 = vmatpush1.bf16.msra.mxu0 %v614
        %732 = vmatprep.subr.bf16.mxu0 0
        %733 = vmatpush1.bf16.msra.mxu0 %v615
        %734 = vmatprep.mubr.bf16.mxu0 %v392
        %735 = vmatmul.mubr.bf16.gmra.mrb[0].mxu0 %v391
        %v736 = vpop.f32.mrb[0].mxu0
        %v737 = vadd.f32 %v378, %v736
        %v738 = vpop.f32.mrb[0].mxu0
        %v739 = vpop.f32.mrb[0].mxu0
        %v740 = vpop.f32.mrb[0].mxu0
        %741 = vdwg.mxu0
        %742 = vmatprep.subr.bf16.mxu0 0
        %743 = vmatpush1.bf16.msra.mxu0 %v616
        %744 = vmatprep.subr.bf16.mxu0 0
        %745 = vmatpush1.bf16.msra.mxu0 %v617
        %746 = vmatprep.subr.bf16.mxu0 0
        %747 = vmatpush1.bf16.msra.mxu0 %v618
        %748 = vmatprep.subr.bf16.mxu0 0
        %749 = vmatpush1.bf16.msra.mxu0 %v619
        %750 = vmatprep.subr.bf16.mxu0 0
        %751 = vmatpush1.bf16.msra.mxu0 %v620
        %752 = vmatprep.subr.bf16.mxu0 0
        %753 = vmatpush1.bf16.msra.mxu0 %v621
        %754 = vmatprep.subr.bf16.mxu0 0
        %755 = vmatpush1.bf16.msra.mxu0 %v622
        %756 = vmatprep.subr.bf16.mxu0 0
        %757 = vmatpush1.bf16.msra.mxu0 %v623
        %758 = vmatprep.subr.bf16.mxu0 0
        %759 = vmatpush1.bf16.msra.mxu0 %v624
        %760 = vmatprep.subr.bf16.mxu0 0
        %761 = vmatpush1.bf16.msra.mxu0 %v625
        %762 = vmatprep.subr.bf16.mxu0 0
        %763 = vmatpush1.bf16.msra.mxu0 %v626
        %764 = vmatprep.subr.bf16.mxu0 0
        %765 = vmatpush1.bf16.msra.mxu0 %v627
        %766 = vmatprep.subr.bf16.mxu0 0
        %767 = vmatpush1.bf16.msra.mxu0 %v628
        %768 = vmatprep.subr.bf16.mxu0 0
        %769 = vmatpush1.bf16.msra.mxu0 %v629
        %770 = vmatprep.subr.bf16.mxu0 0
        %771 = vmatpush1.bf16.msra.mxu0 %v630
        %772 = vmatprep.subr.bf16.mxu0 0
        %773 = vmatpush1.bf16.msra.mxu0 %v631
        %774 = vmatprep.mubr.bf16.mxu0 %v394
        %775 = vmatmul.mubr.bf16.gmra.mrb[0].mxu0 %v393
        %v776 = vpop.f32.mrb[0].mxu0
        %v777 = vadd.f32 %v737, %v776
        %v778 = vpop.f32.mrb[0].mxu0
        %v779 = vpop.f32.mrb[0].mxu0
        %v780 = vpop.f32.mrb[0].mxu0
        %781 = vdwg.mxu0
        %782 = vmatprep.subr.bf16.mxu0 0
        %783 = vmatpush1.bf16.msra.mxu0 %v632
        %784 = vmatprep.subr.bf16.mxu0 0
        %785 = vmatpush1.bf16.msra.mxu0 %v633
        %786 = vmatprep.subr.bf16.mxu0 0
        %787 = vmatpush1.bf16.msra.mxu0 %v634
        %788 = vmatprep.subr.bf16.mxu0 0
        %789 = vmatpush1.bf16.msra.mxu0 %v635
        %790 = vmatprep.subr.bf16.mxu0 0
        %791 = vmatpush1.bf16.msra.mxu0 %v636
        %792 = vmatprep.subr.bf16.mxu0 0
        %793 = vmatpush1.bf16.msra.mxu0 %v637
        %794 = vmatprep.subr.bf16.mxu0 0
        %795 = vmatpush1.bf16.msra.mxu0 %v638
        %796 = vmatprep.subr.bf16.mxu0 0
        %797 = vmatpush1.bf16.msra.mxu0 %v639
        %798 = vmatprep.subr.bf16.mxu0 0
        %799 = vmatpush1.bf16.msra.mxu0 %v640
        %800 = vmatprep.subr.bf16.mxu0 0
        %801 = vmatpush1.bf16.msra.mxu0 %v641
        %802 = vmatprep.subr.bf16.mxu0 0
        %803 = vmatpush1.bf16.msra.mxu0 %v642
        %804 = vmatprep.subr.bf16.mxu0 0
        %805 = vmatpush1.bf16.msra.mxu0 %v643
        %806 = vmatprep.subr.bf16.mxu0 0
        %807 = vmatpush1.bf16.msra.mxu0 %v644
        %808 = vmatprep.subr.bf16.mxu0 0
        %809 = vmatpush1.bf16.msra.mxu0 %v645
        %810 = vmatprep.subr.bf16.mxu0 0
        %811 = vmatpush1.bf16.msra.mxu0 %v646
        %812 = vmatprep.subr.bf16.mxu0 0
        %813 = vmatpush1.bf16.msra.mxu0 %v647
        %814 = vmatprep.mubr.bf16.mxu0 %v396
        %815 = vmatmul.mubr.bf16.gmra.mrb[0].mxu0 %v395
        %v816 = vpop.f32.mrb[0].mxu0
        %v817 = vadd.f32 %v777, %v816
        %v818 = vpop.f32.mrb[0].mxu0
        %v819 = vpop.f32.mrb[0].mxu0
        %v820 = vpop.f32.mrb[0].mxu0
        %821 = vdwg.mxu0
        %822 = vmatprep.subr.bf16.mxu0 0
        %823 = vmatpush1.bf16.msra.mxu0 %v648
        %824 = vmatprep.subr.bf16.mxu0 0
        %825 = vmatpush1.bf16.msra.mxu0 0
        %826 = vmatprep.subr.bf16.mxu0 0
        %827 = vmatpush1.bf16.msra.mxu0 0
        %828 = vmatprep.subr.bf16.mxu0 0
        %829 = vmatpush1.bf16.msra.mxu0 0
        %830 = vmatprep.subr.bf16.mxu0 0
        %831 = vmatpush1.bf16.msra.mxu0 0
        %832 = vmatprep.subr.bf16.mxu0 0
        %833 = vmatpush1.bf16.msra.mxu0 0
        %834 = vmatprep.subr.bf16.mxu0 0
        %835 = vmatpush1.bf16.msra.mxu0 0
        %836 = vmatprep.subr.bf16.mxu0 0
        %837 = vmatpush1.bf16.msra.mxu0 0
        %838 = vmatprep.subr.bf16.mxu0 0
        %839 = vmatpush1.bf16.msra.mxu0 0
        %840 = vmatprep.subr.bf16.mxu0 0
        %841 = vmatpush1.bf16.msra.mxu0 0
        %842 = vmatprep.subr.bf16.mxu0 0
        %843 = vmatpush1.bf16.msra.mxu0 0
        %844 = vmatprep.subr.bf16.mxu0 0
        %845 = vmatpush1.bf16.msra.mxu0 0
        %846 = vmatprep.subr.bf16.mxu0 0
        %847 = vmatpush1.bf16.msra.mxu0 0
        %848 = vmatprep.subr.bf16.mxu0 0
        %849 = vmatpush1.bf16.msra.mxu0 0
        %850 = vmatprep.subr.bf16.mxu0 0
        %851 = vmatpush1.bf16.msra.mxu0 0
        %852 = vmatprep.subr.bf16.mxu0 0
        %853 = vmatpush1.bf16.msra.mxu0 0
        %854 = vmatprep.mubr.bf16.mxu0 0
        %855 = vmatmul.mubr.bf16.gmra.mrb[0].mxu0 %v700
        %v856 = vpop.f32.mrb[0].mxu0
        %v857 = vadd.f32 %v817, %v856
        %v858 = vpop.f32.mrb[0].mxu0
        %v859 = vpop.f32.mrb[0].mxu0
        %v860 = vpop.f32.mrb[0].mxu0
        %861 = vdwg.mxu0
        %v862 = vmax.f32 %v857, 0.0
        %v863 = vpack.c.bf16 %v862, %v862
        %v864 = vld [vmem:[#allocation7] sm:$0xf]
        %v865 = vld [vmem:[#allocation7 + $0x4] sm:$0xf]
        %v866 = vld [vmem:[#allocation7 + $0x8] sm:$0xf]
        %v867 = vld [vmem:[#allocation7 + $0xc] sm:$0xf]
        %v868 = vld [vmem:[#allocation7 + $0x10] sm:$0xf]
        %v869 = vld [vmem:[#allocation7 + $0x14] sm:$0xf]
        %v870 = vld [vmem:[#allocation7 + $0x18] sm:$0xf]
        %v871 = vld [vmem:[#allocation7 + $0x1c] sm:$0xf]
        %v872 = vld [vmem:[#allocation7 + $0x20] sm:$0xf]
        %v873 = vld [vmem:[#allocation7 + $0x24] sm:$0xf]
        %v874 = vld [vmem:[#allocation7 + $0x28] sm:$0xf]
        %v875 = vld [vmem:[#allocation7 + $0x2c] sm:$0xf]
        %v876 = vld [vmem:[#allocation7 + $0x30] sm:$0xf]
        %v877 = vld [vmem:[#allocation7 + $0x34] sm:$0xf]
        %v878 = vld [vmem:[#allocation7 + $0x38] sm:$0xf]
        %v879 = vld [vmem:[#allocation7 + $0x3c] sm:$0xf]
        %v880 = vld [vmem:[%s4] sm:$0x1]
        %v882 = vlaneseq
        %v883 = vshrl.u32 %v882, 7
        %v884 = vsub.s32 0, %v883
        %v885 = vrot.slane %v880, %v884
        %v903 = vunpack.c.l.b16 %v864
        %v904 = vunpack.c.l.b16 %v865
        %v905 = vunpack.c.l.b16 %v866
        %v906 = vunpack.c.l.b16 %v867
        %v907 = vunpack.c.l.b16 %v868
        %v908 = vunpack.c.l.b16 %v869
        %v909 = vunpack.c.l.b16 %v870
        %v910 = vunpack.c.l.b16 %v871
        %v911 = vunpack.c.l.b16 %v872
        %v912 = vunpack.c.l.b16 %v873
        %v913 = vunpack.c.l.b16 %v874
        %v914 = vunpack.c.l.b16 %v875
        %v915 = vunpack.c.l.b16 %v876
        %v916 = vunpack.c.l.b16 %v877
        %v917 = vunpack.c.l.b16 %v878
        %v918 = vunpack.c.l.b16 %v879
        %v919 = vpack.c.b16 %v904, %v903
        %v920 = vpack.c.b16 %v906, %v905
        %v921 = vpack.c.b16 %v908, %v907
        %v922 = vpack.c.b16 %v910, %v909
        %v923 = vpack.c.b16 %v912, %v911
        %v924 = vpack.c.b16 %v914, %v913
        %v925 = vpack.c.b16 %v916, %v915
        %v926 = vpack.c.b16 %v918, %v917
        %935 = vmatprep.subr.bf16.mxu0 0
        %936 = vmatpush1.bf16.msra.mxu0 %v919
        %937 = vmatprep.subr.bf16.mxu0 0
        %938 = vmatpush1.bf16.msra.mxu0 %v920
        %939 = vmatprep.subr.bf16.mxu0 0
        %940 = vmatpush1.bf16.msra.mxu0 %v921
        %941 = vmatprep.subr.bf16.mxu0 0
        %942 = vmatpush1.bf16.msra.mxu0 %v922
        %943 = vmatprep.subr.bf16.mxu0 0
        %944 = vmatpush1.bf16.msra.mxu0 %v923
        %945 = vmatprep.subr.bf16.mxu0 0
        %946 = vmatpush1.bf16.msra.mxu0 %v924
        %947 = vmatprep.subr.bf16.mxu0 0
        %948 = vmatpush1.bf16.msra.mxu0 %v925
        %949 = vmatprep.subr.bf16.mxu0 0
        %950 = vmatpush1.bf16.msra.mxu0 %v926
        %951 = vmatprep.subr.bf16.mxu0 0
        %952 = vmatpush1.bf16.msra.mxu0 0
        %953 = vmatprep.subr.bf16.mxu0 0
        %954 = vmatpush1.bf16.msra.mxu0 0
        %955 = vmatprep.subr.bf16.mxu0 0
        %956 = vmatpush1.bf16.msra.mxu0 0
        %957 = vmatprep.subr.bf16.mxu0 0
        %958 = vmatpush1.bf16.msra.mxu0 0
        %959 = vmatprep.subr.bf16.mxu0 0
        %960 = vmatpush1.bf16.msra.mxu0 0
        %961 = vmatprep.subr.bf16.mxu0 0
        %962 = vmatpush1.bf16.msra.mxu0 0
        %963 = vmatprep.subr.bf16.mxu0 0
        %964 = vmatpush1.bf16.msra.mxu0 0
        %965 = vmatprep.subr.bf16.mxu0 0
        %966 = vmatpush1.bf16.msra.mxu0 0
        %967 = vmatprep.mubr.bf16.mxu0 0
        %968 = vmatmul.mubr.bf16.gmra.mrb[0].mxu0 %v863
        %v969 = vpop.f32.mrb[0].mxu0
        %v970 = vadd.f32 %v885, %v969
        %v971 = vpop.f32.mrb[0].mxu0
        %v972 = vpop.f32.mrb[0].mxu0
        %v973 = vpop.f32.mrb[0].mxu0
        %974 = vdwg.mxu0
        %v975 = vsub.f32 0.0, %v970
        %v976 = vmul.f32 %v975, 1.442695
        %v977 = vpow.pop %v976
        %v978 = vadd.f32 %v977, 1.0
        %v979 = vrcp.pop %v978
        %980 = vst [vmem:[%s269] sm:$0xff] %v979
        %s981 = sand.u32 %s141, 1
        %s982 = scalar_lea.sflag [#allocation4], %s981
        %s983 = sand.u32 %s141, 1
        %s984 = smul.addr %s983, 8
        %s985 = scalar_lea.vmem [#allocation8], %s984
        // Predicated region
        $region53: #{tpu_custom_call.1} parent=39 // pred_check
          %p986 = pneg %p151
        $region54: #{tpu_custom_call.1} parent=39 // pred_check_branch
          %988 = sbr.rel (%p986) target = $region56
        $region55: #{tpu_custom_call.1} parent=39 // pred_region
          %s990 = ssub.s32 128, 128
          %991 = vsyncadd %s982, %s990
          %s992 = smul.addr %s23, 128
          %s993 = scalar_lea.hbm %s5, %s992
          %s995 = sshll.u32 %s985, 4
          %s996 = int_to_ptr.vmem [resolvable:$true] %s995
          %998 = dma.vmem_to_hbm [thread:$0]  %s996, 128, %s993, %s982
        $region56: #{tpu_custom_call.1} parent=39 // pred_fallthru
          _
      $region40: #{tpu_custom_call.1} parent=5 // pred_fallthru
        _
      %p999 = scmp.le.s32.totalorder 2, %s18
      // Predicated region
      $region57: #{tpu_custom_call.1} parent=5 // pred_check
        %p1000 = pneg %p999
      $region58: #{tpu_custom_call.1} parent=5 // pred_check_branch
        %1002 = sbr.rel (%p1000) target = $region60
      $region59: #{tpu_custom_call.1} parent=5 // pred_region
        %s1003 = ssub.s32 %s18, 2
        // Predicated region
        $region61: #{tpu_custom_call.1} parent=59 // pred_check
          %p1004 = pneg %p157
        $region62: #{tpu_custom_call.1} parent=59 // pred_check_branch
          %1006 = sbr.rel (%p1004) target = $region64
        $region63: #{tpu_custom_call.1} parent=59 // pred_region
          %s1007 = sand.u32 %s142, 1
          %s1008 = scalar_lea.sflag [#allocation4], %s1007
          %s1009 = sand.u32 %s142, 1
          %s1010 = smul.addr %s1009, 8
          %s1011 = scalar_lea.vmem [#allocation8], %s1010
          %1012 = dma.done %s1008, 128
        $region64: #{tpu_custom_call.1} parent=59 // pred_fallthru
          _
      $region60: #{tpu_custom_call.1} parent=5 // pred_fallthru
        _
    $region6: #{tpu_custom_call.1} parent=1 // loop_footer
      %s22 = sadd.s32 1, %s18
    $region7: #{tpu_custom_call.1} parent=1 // loop_footer_branch
      %17 = sbr.rel target = $region3
    $region8: #{tpu_custom_call.1} parent=1 // loop_exit
      _
    %1013 = vsyncpa [#allocation3], 1
    %s1014 = scalar_lea.sflag [#allocation3], 1
    %1015 = vsyncpa %s1014, 1
    %1016 = vsyncpa [#allocation6], 1
    %1017 = vsyncpa [#allocation4], 1
    %s1018 = scalar_lea.sflag [#allocation4], 1
    %1019 = vsyncpa %s1018, 1

</llo_original>
